<compile_context>
chip_gen: v5e
topology: v5e:2x2
jax: 0.10.0
libtpu: 0.0.40
codegen_flags: <defaults>
</compile_context>

<pallas_src>
import jax
import jax.numpy as jnp
from jax.experimental import pallas as pl
from jax.experimental.pallas import tpu as pltpu


def sig_T_kernel(w_ref, t_ref):
    """One (TM, C) row tile of T = row_l1_normalize(I + sigmoid(w) * co)."""
    tm, n_cols = w_ref.shape
    row0 = pl.program_id(0) * tm

    # sigmoid on the EUP; compute in f32 regardless of input dtype.
    sig = jax.nn.sigmoid(w_ref[...].astype(jnp.float32))

    # Diagonal mask from a single (tm, C) column iota compared against a
    # (tm, 1) vector of global row indices (saves one full-tile int32 temp).
    col_idx = jax.lax.broadcasted_iota(jnp.int32, (tm, n_cols), 1)
    row_ids = row0 + jax.lax.broadcasted_iota(jnp.int32, (tm, 1), 0)
    is_diag = col_idx == row_ids  # broadcast -> (tm, n_cols)

    # Row L1 sum: off-diagonal sigmoid entries (all >= 0) plus exactly 1.0 from
    # the identity.  row_sum >= 1, so PyTorch's eps=1e-12 clamp is dead code.
    off_diag_sum = jnp.sum(jnp.where(is_diag, jnp.float32(0.0), sig),
                           axis=1, keepdims=True)
    # Exact reciprocal (approx=False adds a VPU Newton step; only a (tm,1)
    # vector, so cost is negligible and the 1e-6 reference tolerance holds).
    inv = pl.reciprocal(off_diag_sum + jnp.float32(1.0))

    # diag -> 1 * inv, off-diag -> sig * inv.
    t_ref[...] = jnp.where(is_diag, inv, sig * inv).astype(t_ref.dtype)


def _vmem_budget_bytes():
    """Generation-aware VMEM budget (v5e/v6e: 128 MiB phys, v7x: 64 MiB/TC)."""
    try:
        cap = pltpu.get_tpu_info().vmem_capacity_bytes
    except Exception:
        cap = 64 * 1024 * 1024  # conservative floor (v7x per-TC)
    return int(min(cap // 2, 48 * 1024 * 1024))


def _choose_row_tile(n, in_itemsize, out_itemsize, vmem_budget_bytes):
    """Pick the row tile TM for a (TM, n) block.

    Rules: respect sublane packing for the input dtype, budget double-buffered
    I/O tiles plus ~3 live full-tile f32/int32 intermediates, guarantee >= 2
    grid steps on large matrices (v7x 2-TC sharding), and prefer a TM that
    divides n so there is no padded tail tile.
    """
    mult = max(8, 32 // in_itemsize)  # f32 -> 8, bf16 -> 16, int8/fp8 -> 32
    if n < 128 or n % mult != 0:
        # Tiny / misaligned: one whole-matrix block (full dims are always legal).
        return n

    # Per-row footprint: 2x input + 2x output (pipeline double buffers) plus
    # ~3 full-tile 4-byte intermediates (sigmoid tile, col iota, masked copy).
    bytes_per_row = n * (2 * in_itemsize + 2 * out_itemsize + 3 * 4)
    max_rows = max(mult, vmem_budget_bytes // bytes_per_row)

    # Cap so the row axis has >= 2 grid steps (lets v7x shard across both TCs).
    two_step_cap = max(mult, ((n // 2) // mult) * mult)
    tm = min((max_rows // mult) * mult, two_step_cap, n)
    tm = max(tm, mult)

    # Prefer the largest tm <= cap that divides n (no padded tail tile).
    t = tm
    while t >= mult:
        if n % t == 0:
            return int(t)
        t -= mult
    return int(tm)  # fall back to masked tail handling


def sig_T_forward(w, *, tile_rows=None, out_dtype=None, vmem_budget_bytes=None):
    """Pallas path: row-tiled, pipelined computation of T."""
    n = w.shape[0]
    out_dt = jnp.dtype(out_dtype) if out_dtype is not None else jnp.dtype(w.dtype)
    in_itemsize = jnp.dtype(w.dtype).itemsize
    out_itemsize = out_dt.itemsize

    budget = (int(vmem_budget_bytes) if vmem_budget_bytes is not None
              else _vmem_budget_bytes())
    tm = tile_rows if tile_rows is not None else _choose_row_tile(
        n, in_itemsize, out_itemsize, budget)

    grid = (pl.cdiv(n, tm),)
    cost = pl.CostEstimate(
        flops=6 * n * n,                     # mask/select/mul/add per element
        transcendentals=n * n,               # sigmoid
        bytes_accessed=n * n * (in_itemsize + out_itemsize),
    )
    return pl.pallas_call(
        sig_T_kernel,
        out_shape=jax.ShapeDtypeStruct((n, n), out_dt),
        grid=grid,
        in_specs=[pl.BlockSpec((tm, n), lambda i: (i, 0))],
        out_specs=pl.BlockSpec((tm, n), lambda i: (i, 0)),
        compiler_params=pltpu.CompilerParams(
            dimension_semantics=("parallel",),
            vmem_limit_bytes=budget + (4 << 20),  # headroom for Mosaic scratch
        ),
        cost_estimate=cost,
    )(w)


def sig_T_reference(w):
    """Pure-JAX reference for correctness checking."""
    n = w.shape[0]
    sig = jax.nn.sigmoid(w.astype(jnp.float32))
    co = jnp.ones((n, n), jnp.float32) - jnp.eye(n, dtype=jnp.float32)
    T = jnp.eye(n, dtype=jnp.float32) + sig * co
    denom = jnp.maximum(jnp.sum(jnp.abs(T), axis=1, keepdims=True), 1e-12)
    return T / denom


def sig_T(w):
    """Dispatcher: tiny class counts should be fused into the consumer rather
    than paying a standalone kernel launch + HBM round trip for T."""
    if w.shape[0] < 128:
        return sig_T_reference(w)  # XLA fuses this with downstream ops
    return sig_T_forward(w)


if __name__ == "__main__":
    key = jax.random.PRNGKey(0)

    # --- case 1: module-sized input (C=16, single whole-matrix block) ---
    num_classes, init = 16, 2.0
    w_small = -init * jnp.ones((num_classes, num_classes), dtype=jnp.float32)
    T_small = jax.block_until_ready(sig_T_forward(w_small))
    T_small_ref = sig_T_reference(w_small)
    assert T_small.shape == (num_classes, num_classes)
    assert jnp.allclose(T_small, T_small_ref, atol=1e-6, rtol=1e-6), "small-case mismatch"
    assert jnp.allclose(jnp.sum(T_small, axis=1), 1.0, atol=1e-6)

    # --- case 2: larger f32 matrix exercising the tiled grid (>= 2 steps) ---
    n_big = 256
    w_big = jax.random.normal(key, (n_big, n_big), dtype=jnp.float32)
    T_big = jax.block_until_ready(sig_T_forward(w_big))
    T_big_ref = sig_T_reference(w_big)
    assert jnp.allclose(T_big, T_big_ref, atol=1e-6, rtol=1e-6), "tiled-case mismatch"
    assert jnp.allclose(jnp.sum(T_big, axis=1), 1.0, atol=1e-6)

    # --- case 3: bf16 input -> bf16 output (narrow writeback, sublane mult 16) ---
    w_bf16 = w_big.astype(jnp.bfloat16)
    T_bf16 = jax.block_until_ready(sig_T_forward(w_bf16))
    T_bf16_ref = sig_T_reference(w_bf16)
    assert T_bf16.dtype == jnp.bfloat16
    assert jnp.allclose(T_bf16.astype(jnp.float32), T_bf16_ref, atol=2e-2), "bf16 mismatch"

    print("KERNEL_OK")
</pallas_src>

<mosaic_0001>
module attributes {stable_mosaic.version = 11 : i64} {
  func.func @sig_T_kernel(%arg0: i32, %arg1: memref<16x16xf32, #tpu.memory_space<vmem>>, %arg2: memref<16x16xf32, #tpu.memory_space<vmem>>) attributes {dimension_semantics = [#tpu.dimension_semantics<parallel>], iteration_bounds = array<i64: 1>, scalar_prefetch = 0 : i64, scratch_operands = 0 : i64, tpu.core_type = #tpu.core_type<tc>, window_params = [{transform_indices = @transform_0, window_bounds = array<i64: 16, 16>}, {transform_indices = @transform_1, window_bounds = array<i64: 16, 16>}]} {
    %c16_i32 = arith.constant 16 : i32
    %0 = arith.muli %arg0, %c16_i32 : i32
    %c0 = arith.constant 0 : index
    %c0_0 = arith.constant 0 : index
    %1 = vector.load %arg1[%c0, %c0_0] : memref<16x16xf32, #tpu.memory_space<vmem>>, vector<16x16xf32>
    %2 = arith.negf %1 : vector<16x16xf32>
    %3 = math.exp %2 : vector<16x16xf32>
    %cst = arith.constant 1.000000e+00 : f32
    %4 = vector.broadcast %cst : f32 to vector<16x16xf32>
    %5 = arith.addf %4, %3 : vector<16x16xf32>
    %6 = arith.divf %4, %5 : vector<16x16xf32>
    %7 = tpu.iota {dimensions = array<i32: 1>} : vector<16x16xi32>
    %8 = tpu.iota {dimensions = array<i32: 0>} : vector<16x1xi32>
    %9 = vector.broadcast %0 : i32 to vector<16x1xi32>
    %10 = arith.addi %9, %8 : vector<16x1xi32>
    %11 = vector.broadcast %10 : vector<16x1xi32> to vector<16x16xi32>
    %12 = arith.cmpi eq, %7, %11 : vector<16x16xi32>
    %cst_1 = arith.constant 0.000000e+00 : f32
    %13 = vector.broadcast %cst_1 : f32 to vector<16x16xf32>
    %14 = arith.select %12, %13, %6 : vector<16x16xi1>, vector<16x16xf32>
    %cst_2 = arith.constant dense<0.000000e+00> : vector<16xf32>
    %15 = vector.multi_reduction <add>, %14, %cst_2 [1] : vector<16x16xf32> to vector<16xf32>
    %16 = vector.shape_cast %15 : vector<16xf32> to vector<16x1xf32>
    %cst_3 = arith.constant 1.000000e+00 : f32
    %17 = vector.broadcast %cst_3 : f32 to vector<16x1xf32>
    %18 = arith.addf %16, %17 : vector<16x1xf32>
    %19 = tpu.reciprocal %18 : vector<16x1xf32> -> vector<16x1xf32>
    %20 = vector.broadcast %19 : vector<16x1xf32> to vector<16x16xf32>
    %21 = arith.mulf %6, %20 : vector<16x16xf32>
    %22 = vector.shape_cast %19 : vector<16x1xf32> to vector<16x1xf32>
    %23 = vector.broadcast %22 : vector<16x1xf32> to vector<16x16xf32>
    %24 = arith.select %12, %23, %21 : vector<16x16xi1>, vector<16x16xf32>
    %c0_4 = arith.constant 0 : index
    %c0_5 = arith.constant 0 : index
    %25 = vector.load %arg2[%c0_4, %c0_5] : memref<16x16xf32, #tpu.memory_space<vmem>>, vector<16x16xf32>
    tpu.vector_store %arg2[%c0_4, %c0_5], %24 {strides = array<i32>} : memref<16x16xf32, #tpu.memory_space<vmem>>, vector<16x16xf32>,
    return
  }
  func.func @transform_0(%arg0: i32) -> (i32, i32) {
    %c0_i32 = arith.constant 0 : i32
    %c0_i32_0 = arith.constant 0 : i32
    return %arg0, %c0_i32 : i32, i32
  }
  func.func @transform_1(%arg0: i32) -> (i32, i32) {
    %c0_i32 = arith.constant 0 : i32
    %c0_i32_0 = arith.constant 0 : i32
    return %arg0, %c0_i32 : i32, i32
  }
}

</mosaic_0001>

<llo_original>
// kernel: tpu_custom_call.1
$region0: #{tpu_custom_call.1}
  #allocation0 [shape = 'u32[]', space=smem, size = 0x4, offset = 0x4, fixed_abs, tag = 'smem constant byte address 0x4 - core index']
  #allocation1 [shape = 'u32[72,128]{1,0:T(1,128)}', space=vmem, size = 0x9000, scoped, tag = 'internal scratch']
  %s0 = inlined_call_operand.hbm [shape: f32[16,16], index: 0, kind: input, shape index: {}]
  %s1 = inlined_call_operand.hbm [shape: f32[16,16], index: 1, kind: output, shape index: {}]
  %s2 = sld [smem:[#allocation0]]
  $region18: #{tpu_custom_call.1} parent=0
    _
  %s4 = ssub.s32 1, %s2
  %s5 = scalar_select 0, %s4, %s2
  $region1: #{tpu_custom_call.1} parent=0
    #allocation2 [shape = 'u8[8192]{0}', space=vmem, size = 0x2000, scoped, tag = 'input window, operand 0, single buffered']
    #allocation3 [shape = 's32[1]{0}', space=sflag, size = 0x4, scoped, tag = 'scoped memory for tpu_custom_call.1']
    #allocation4 [shape = 's32[1]{0}', space=sflag, size = 0x4, scoped, tag = 'scoped memory for tpu_custom_call.1']
    #allocation5 [shape = 'u8[8192]{0}', space=vmem, size = 0x2000, scoped, tag = 'output window, operand 0, single buffered']
    %6 = vsyncpa [#allocation3], 0
    %7 = vsyncpa [#allocation4], 0
    // Predicated region
    $region2: #{tpu_custom_call.1} parent=1 // pred_check
      _
    $region3: #{tpu_custom_call.1} parent=1 // pred_check_branch
      %9 = sbr.rel (0) target = $region5
    $region4: #{tpu_custom_call.1} parent=1 // pred_region
      %11 = vsyncadd [#allocation3], 0
      %s12 = sshll.u32 %s0, 4
      %s13 = int_to_ptr.hbm [resolvable:$true] %s12
      %s14 = sshll.u32 [#allocation2], 4
      %s15 = int_to_ptr.vmem [resolvable:$true] %s14
      %20 = dma.hbm_to_vmem [thread:$0]  %s13, 256, %s15, [#allocation3], 128, 128, 8
    $region5: #{tpu_custom_call.1} parent=1 // pred_fallthru
      _
    // Predicated region
    $region6: #{tpu_custom_call.1} parent=1 // pred_check
      _
    $region7: #{tpu_custom_call.1} parent=1 // pred_check_branch
      %22 = sbr.rel (0) target = $region9
    $region8: #{tpu_custom_call.1} parent=1 // pred_region
      %24 = dma.done [#allocation3], 256
    $region9: #{tpu_custom_call.1} parent=1 // pred_fallthru
      _
    %s25 = smul.u32 0, 16
    %v26 = vld [vmem:[#allocation2] sm:$0xff]
    %v27 = vld [vmem:[#allocation2 + $0x8] sm:$0xff]
    %v28 = vxor.u32 %v26, 2147483648
    %v29 = vxor.u32 %v27, 2147483648
    %v30 = vmul.f32 %v28, 1.442695
    %v31 = vpow.pop %v30
    %v32 = vmul.f32 %v29, 1.442695
    %v33 = vpow.pop %v32
    %v34 = vadd.f32 %v31, 1.0
    %v35 = vadd.f32 %v33, 1.0
    %v36 = vrcp.pop %v34
    %v37 = vmul.f32 %v34, %v36
    %v38 = vsub.f32 1.0, %v37
    %v39 = vmul.f32 %v36, %v38
    %v40 = vadd.f32 %v36, %v39
    %vm41 = vweird.f32 %v34
    %vm42 = vweird.f32 %v36
    %vm43 = vmor %vm41, %vm42
    %v44 = vsel %vm43, %v36, %v40
    %v45 = vand.u32 2147483647, %v34
    %vm46 = vcmp.eq.f32.partialorder %v45, 8.507059e+37
    %v47 = vand.u32 %v34, 2147483648
    %v48 = vor.u32 1.1754944e-38, %v47
    %v49 = vsel %vm46, %v48, %v44
    %v50 = vmul.f32 1.0, %v49
    %v51 = vrcp.pop %v35
    %v52 = vmul.f32 %v35, %v51
    %v53 = vsub.f32 1.0, %v52
    %v54 = vmul.f32 %v51, %v53
    %v55 = vadd.f32 %v51, %v54
    %vm56 = vweird.f32 %v35
    %vm57 = vweird.f32 %v51
    %vm58 = vmor %vm56, %vm57
    %v59 = vsel %vm58, %v51, %v55
    %v60 = vand.u32 2147483647, %v35
    %vm61 = vcmp.eq.f32.partialorder %v60, 8.507059e+37
    %v62 = vand.u32 %v35, 2147483648
    %v63 = vor.u32 1.1754944e-38, %v62
    %v64 = vsel %vm61, %v63, %v59
    %v65 = vmul.f32 1.0, %v64
    %v66 = vlaneseq
    %v67 = vand.u32 %v66, 127
    %v68 = vlaneseq
    %v69 = vshrl.u32 %v68, 7
    %v70 = vadd.s32 %v69, 8
    %v71 = vstv %s25
    %v72 = vadd.s32 %v71, %v69
    %v73 = vadd.s32 %v71, %v70
    %vm74 = vcmp.eq.s32.totalorder %v67, %v72
    %vm75 = vcmp.eq.s32.totalorder %v67, %v73
    %v76 = vsel %vm74, 0.0, %v50
    %v77 = vsel %vm75, 0.0, %v65
    %vm78 = vcmask 130048
    %v79 = vsel %vm78, %v76, 0.0
    %80 = vadd.xlane.f32.xlu0 %v79
    %v81 = vpop.xlane.xlu0 %80
    %v82 = vsel %vm78, %v77, 0.0
    %83 = vadd.xlane.f32.xlu0 %v82
    %v84 = vpop.xlane.xlu0 %83
    %v85 = vadd.f32 %v81, 1.0
    %v86 = vadd.f32 %v84, 1.0
    %v87 = vrcp.pop %v85
    %v88 = vmul.f32 %v85, %v87
    %v89 = vsub.f32 1.0, %v88
    %v90 = vmul.f32 %v87, %v89
    %v91 = vadd.f32 %v87, %v90
    %vm92 = vweird.f32 %v85
    %vm93 = vweird.f32 %v87
    %vm94 = vmor %vm92, %vm93
    %v95 = vsel %vm94, %v87, %v91
    %v96 = vand.u32 2147483647, %v85
    %vm97 = vcmp.eq.f32.partialorder %v96, 8.507059e+37
    %v98 = vand.u32 %v85, 2147483648
    %v99 = vor.u32 1.1754944e-38, %v98
    %v100 = vsel %vm97, %v99, %v95
    %v101 = vrcp.pop %v86
    %v102 = vmul.f32 %v86, %v101
    %v103 = vsub.f32 1.0, %v102
    %v104 = vmul.f32 %v101, %v103
    %v105 = vadd.f32 %v101, %v104
    %vm106 = vweird.f32 %v86
    %vm107 = vweird.f32 %v101
    %vm108 = vmor %vm106, %vm107
    %v109 = vsel %vm108, %v101, %v105
    %v110 = vand.u32 2147483647, %v86
    %vm111 = vcmp.eq.f32.partialorder %v110, 8.507059e+37
    %v112 = vand.u32 %v86, 2147483648
    %v113 = vor.u32 1.1754944e-38, %v112
    %v114 = vsel %vm111, %v113, %v109
    %v115 = vmul.f32 %v50, %v100
    %v116 = vmul.f32 %v65, %v114
    %v117 = vsel %vm74, %v100, %v115
    %v118 = vsel %vm75, %v114, %v116
    %119 = vst.msk [vmem:[#allocation5] sm:$0xff] %vm78, %v117
    %120 = vst.msk [vmem:[#allocation5 + $0x8] sm:$0xff] %vm78, %v118
    // Predicated region
    $region10: #{tpu_custom_call.1} parent=1 // pred_check
      _
    $region11: #{tpu_custom_call.1} parent=1 // pred_check_branch
      %122 = sbr.rel (0) target = $region13
    $region12: #{tpu_custom_call.1} parent=1 // pred_region
      %124 = vsyncadd [#allocation4], 0
      %s125 = sshll.u32 [#allocation5], 4
      %s126 = int_to_ptr.vmem [resolvable:$true] %s125
      %s127 = sshll.u32 %s1, 4
      %s128 = int_to_ptr.hbm [resolvable:$true] %s127
      %133 = dma.vmem_to_hbm [thread:$0]  %s126, 256, %s128, [#allocation4], 128, 128, 8
    $region13: #{tpu_custom_call.1} parent=1 // pred_fallthru
      _
    // Predicated region
    $region14: #{tpu_custom_call.1} parent=1 // pred_check
      _
    $region15: #{tpu_custom_call.1} parent=1 // pred_check_branch
      %135 = sbr.rel (0) target = $region17
    $region16: #{tpu_custom_call.1} parent=1 // pred_region
      %137 = dma.done [#allocation4], 256
    $region17: #{tpu_custom_call.1} parent=1 // pred_fallthru
      _
    %138 = vsyncpa [#allocation3], 1
    %139 = vsyncpa [#allocation4], 1

</llo_original>
